<compile_context>
chip_gen: v7x
topology: tpu7x:2x2x1
jax: 0.10.0
libtpu: 0.0.40
codegen_flags: <defaults>
</compile_context>

<pallas_src>
import functools
import math

import jax
import jax.numpy as jnp
from jax.experimental import pallas as pl
from jax.experimental.pallas import tpu as pltpu


_INV_SQRT2 = 1.0 / math.sqrt(2.0)


def _gelu_f32(x, approximate=False):
    # approximate=False matches torch.nn.functional.gelu's default (erf-based).
    # approximate=True (tanh) runs on the EUP and frees the VALU slot, at the
    # cost of a slight numerics change vs torch's default.
    if approximate:
        return jax.nn.gelu(x, approximate=True)
    return 0.5 * x * (1.0 + jax.lax.erf(x * _INV_SQRT2))


def _round_up(x, m):
    return ((x + m - 1) // m) * m


def _nbytes(shape, dtype):
    n = 1
    for d in shape:
        n *= int(d)
    return n * jnp.dtype(dtype).itemsize


def _pick_tiling(B):
    """Generation-aware (Bp, TM) selection. Pure host-side heuristic."""
    try:
        kind = jax.devices()[0].device_kind.lower()
    except Exception:  # pragma: no cover - defensive
        kind = ""
    is_v6 = "v6" in kind
    is_v7 = "v7" in kind or "7x" in kind

    if B < 128:
        bp = _round_up(max(B, 1), 8)          # f32 sublane minimum
        return bp, bp                          # single tile, grid=(1,)
    if is_v6:
        tm = 256 if B >= 256 else 128          # fill the 2x256 MXU rows
    elif is_v7:
        tm = 256 if B >= 512 else 128          # keep >= 2 grid steps (2 TCs)
    else:
        tm = 128                               # v5e: 4x128x128 MXUs
    return _round_up(B, tm), tm


# ----------------------------------------------------------------------------
# Kernel
# ----------------------------------------------------------------------------
def lin_model_kernel(tok_ref, w1_ref, b1_ref, w2_ref, b2_ref, w3_ref, b3_ref,
                     o_ref, *, approximate_gelu=False):
    # tok_ref: (TM, T)    int32  flat (position, vocab) ids: tok[b,t] + t*V
    # w1_ref : (T*V, H1)  bf16   emb folded into lin1
    # b1_ref : (1, H1)    f32    b1 + pse folded into lin1 bias
    # w2_ref : (H1, C)    bf16   b2_ref: (1, C) f32
    # w3_ref : (C, 128)   f32    zero-padded lane-dense head; b3_ref: (1, 128)
    # o_ref  : (TM, 128)  f32    only [:, :2] is meaningful
    TM, T = tok_ref.shape
    TV = w1_ref.shape[0]

    # Flat one-hot over the (position, vocab) axis, built with T cheap VALU
    # compares/ORs (no per-position matmuls, no reshape/relayout).
    col = jax.lax.broadcasted_iota(jnp.int32, (TM, TV), 1)
    hit = col == tok_ref[:, 0:1]
    for t in range(1, T):                      # T is small and static
        hit = jnp.logical_or(hit, col == tok_ref[:, t:t + 1])
    onehot = hit.astype(jnp.bfloat16)          # (TM, T*V) bf16 MXU operand

    # Fused gather + positional add + flatten + lin1: single K=T*V matmul.
    h1 = jnp.dot(onehot, w1_ref[...], preferred_element_type=jnp.float32)
    h = _gelu_f32(h1 + b1_ref[...], approximate_gelu)
    # TODO(synk): nn.Dropout treated as identity (eval / inference mode).

    h2 = jnp.dot(h.astype(jnp.bfloat16), w2_ref[...],
                 preferred_element_type=jnp.float32)
    h = _gelu_f32(h2 + b2_ref[...], approximate_gelu)

    # Tiny head kept in f32 for logit precision; lane-dense unmasked store.
    o_ref[...] = (jnp.dot(h, w3_ref[...], preferred_element_type=jnp.float32)
                  + b3_ref[...])


# ----------------------------------------------------------------------------
# Host-side weight folding (do ONCE, outside the forward pass)
# ----------------------------------------------------------------------------
def fold_params(params, max_length):
    emb = params["emb"]                         # (V, C) f32
    pse = params["pse"]                         # (T, C) f32
    V, C = emb.shape
    T = max_length
    H1 = params["b1"].shape[1]
    w1 = params["w1"]                           # (T*C, H1), stored (in, out)

    w1_tch = w1.reshape(T, C, H1)
    # w1_eff[t*V + v, :] = emb[v] @ w1[t]  (f32 fold, then cast to bf16)
    w1_eff = jnp.einsum("vc,tch->tvh", emb, w1_tch).reshape(T * V, H1)
    # positional contribution + original bias folded into one f32 bias row
    b1_eff = params["b1"] + pse.reshape(1, T * C) @ w1

    NP = 128                                    # lane-dense padded head width
    w3_p = jnp.zeros((C, NP), jnp.float32).at[:, :2].set(params["w3"])
    b3_p = jnp.zeros((1, NP), jnp.float32).at[:, :2].set(params["b3"])

    return {
        "V": V, "T": T, "C": C, "H1": H1, "NP": NP,
        "w1_eff": w1_eff.astype(jnp.bfloat16),
        "b1_eff": b1_eff.astype(jnp.float32),
        "w2": params["w2"].astype(jnp.bfloat16),
        "b2": params["b2"].astype(jnp.float32),
        "w3": w3_p,
        "b3": b3_p,
    }


# ----------------------------------------------------------------------------
# Forward pass
# ----------------------------------------------------------------------------
def lin_model_forward(x_tokens, folded, *, tm=None, approximate_gelu=False,
                      single_buffer_weights=True):
    """LinModel forward, one fused Pallas kernel.

    x_tokens: (B, T) int32 token ids in [0, V); T must equal max_length.
    folded:   output of fold_params().
    """
    B, T = x_tokens.shape
    V, C, H1, NP = folded["V"], folded["C"], folded["H1"], folded["NP"]
    assert T == folded["T"], "flatten + lin1 requires T == max_length"
    TV = folded["w1_eff"].shape[0]

    if tm is None:
        Bp, TM = _pick_tiling(B)
    else:
        TM = tm
        Bp = _round_up(B, TM)

    # ---- host-side layout plumbing only (no compute) -----------------------
    # Flat (position, vocab) ids; padded rows (id 0) are computed + sliced off.
    tok_flat = x_tokens.astype(jnp.int32) + (jnp.arange(T, dtype=jnp.int32) * V)[None, :]
    tok_flat = jnp.pad(tok_flat, ((0, Bp - B), (0, 0)))

    w1_eff, b1_eff = folded["w1_eff"], folded["b1_eff"]
    w2, b2, w3, b3 = folded["w2"], folded["b2"], folded["w3"], folded["b3"]

    # VMEM budget sized from the actual blocks.
    wbuf = 1 if single_buffer_weights else 2
    weight_bytes = (_nbytes((TV, H1), jnp.bfloat16) + _nbytes((1, H1), jnp.float32)
                    + _nbytes((H1, C), jnp.bfloat16) + _nbytes((1, C), jnp.float32)
                    + _nbytes((C, NP), jnp.float32) + _nbytes((1, NP), jnp.float32))
    stream_bytes = 2 * (_nbytes((TM, T), jnp.int32) + _nbytes((TM, NP), jnp.float32))
    needed = wbuf * weight_bytes + stream_bytes
    vmem_limit = int(min(max(2 * needed + (2 << 20), 8 << 20), 48 << 20))

    flops = 2 * Bp * (TV * H1 + H1 * C + C * NP)
    bytes_accessed = (_nbytes((Bp, T), jnp.int32) + weight_bytes
                      + _nbytes((Bp, NP), jnp.float32))

    kernel = functools.partial(lin_model_kernel, approximate_gelu=approximate_gelu)

    def run(use_buffered):
        kw = {"pipeline_mode": pl.Buffered(1)} if use_buffered else {}

        def const(shape):
            return pl.BlockSpec(shape, lambda i: (0,) * len(shape), **kw)

        in_specs = [
            pl.BlockSpec((TM, T), lambda i: (i, 0)),   # token tile (pipelined)
            const((TV, H1)),                           # w1_eff (constant block)
            const((1, H1)),                            # b1_eff
            const((H1, C)),                            # w2
            const((1, C)),                             # b2
            const((C, NP)),                            # w3 (lane-dense pad)
            const((1, NP)),                            # b3 (lane-dense pad)
        ]
        return pl.pallas_call(
            kernel,
            out_shape=jax.ShapeDtypeStruct((Bp, NP), jnp.float32),
            grid=(Bp // TM,),
            in_specs=in_specs,
            out_specs=pl.BlockSpec((TM, NP), lambda i: (i, 0)),
            compiler_params=pltpu.CompilerParams(
                dimension_semantics=("parallel",),     # shards across v7x TCs
                vmem_limit_bytes=vmem_limit),
            cost_estimate=pl.CostEstimate(
                flops=flops,
                transcendentals=Bp * (H1 + C),         # advisory only
                bytes_accessed=bytes_accessed),
        )(tok_flat, w1_eff, b1_eff, w2, b2, w3, b3)

    if single_buffer_weights:
        try:
            out = run(True)
        except Exception:
            out = run(False)   # fallback if pipeline_mode/Buffered unsupported
    else:
        out = run(False)

    return out[:B, :2]


# ----------------------------------------------------------------------------
# Deterministic synthetic init (shapes match the nn.Module.__init__)
# ----------------------------------------------------------------------------
def init_params(key, n_vocab, n_embd, max_length):
    ks = jax.random.split(key, 8)
    d_in1 = n_embd * max_length
    d_h1 = n_embd * 4

    def lin_init(kw, kb, fan_in, fan_out):
        bound = 1.0 / math.sqrt(fan_in)
        w = jax.random.uniform(kw, (fan_in, fan_out), jnp.float32, -bound, bound)
        b = jax.random.uniform(kb, (1, fan_out), jnp.float32, -bound, bound)
        return w, b

    w1, b1 = lin_init(ks[2], ks[3], d_in1, d_h1)
    w2, b2 = lin_init(ks[4], ks[5], d_h1, n_embd)
    w3, b3 = lin_init(ks[6], ks[7], n_embd, 2)

    return {
        "emb": jax.random.normal(ks[0], (n_vocab, n_embd), jnp.float32),
        "pse": jax.random.normal(ks[1], (max_length, n_embd), jnp.float32),
        "w1": w1, "b1": b1,
        "w2": w2, "b2": b2,
        "w3": w3, "b3": b3,
    }


if __name__ == "__main__":
    # Small shapes consistent with the module: B=2, T=max_length=8,
    # n_vocab=32, n_embd=32  ->  lin1: 256->128, lin2: 128->32, lin3: 32->2.
    n_vocab, n_embd, max_length, dropout = 32, 32, 8, 0.1
    B, T = 2, max_length

    key = jax.random.PRNGKey(0)
    k_tok, k_params = jax.random.split(key)
    params = init_params(k_params, n_vocab, n_embd, max_length)
    x_tokens = jax.random.randint(k_tok, (B, T), 0, n_vocab, dtype=jnp.int32)

    folded = fold_params(params, max_length)      # one-time host-side fold
    out = lin_model_forward(x_tokens, folded)
    jax.block_until_ready(out)
    assert out.shape == (B, 2) and out.dtype == jnp.float32

    # Pure-JAX f32 reference of the same forward pass (erf GELU, like torch).
    h = params["emb"][x_tokens] + params["pse"][jnp.arange(T)][None]
    h = h.reshape(B, -1)
    h = _gelu_f32(h @ params["w1"] + params["b1"])
    h = _gelu_f32(h @ params["w2"] + params["b2"])
    ref = h @ params["w3"] + params["b3"]

    # Tolerance relaxed vs the old bit-match check: kernel matmuls use bf16
    # operands with f32 accumulation.
    err = jnp.max(jnp.abs(out - ref))
    assert jnp.allclose(out, ref, atol=2e-2, rtol=2e-2), f"max abs err {err}"

    print("KERNEL_OK")
</pallas_src>

<mosaic_0001>
module attributes {stable_mosaic.version = 11 : i64} {
  func.func @lin_model_kernel(%arg0: i32, %arg1: memref<8x8xi32, #tpu.memory_space<vmem>>, %arg2: memref<256x128xbf16, #tpu.memory_space<vmem>>, %arg3: memref<1x128xf32, #tpu.memory_space<vmem>>, %arg4: memref<128x32xbf16, #tpu.memory_space<vmem>>, %arg5: memref<1x32xf32, #tpu.memory_space<vmem>>, %arg6: memref<32x128xf32, #tpu.memory_space<vmem>>, %arg7: memref<1x128xf32, #tpu.memory_space<vmem>>, %arg8: memref<8x128xf32, #tpu.memory_space<vmem>>) attributes {dimension_semantics = [#tpu.dimension_semantics<parallel>], iteration_bounds = array<i64: 1>, scalar_prefetch = 0 : i64, scratch_operands = 0 : i64, tpu.core_type = #tpu.core_type<tc>, window_params = [{transform_indices = @transform_0, window_bounds = array<i64: 8, 8>}, {pipeline_mode = #tpu.pipeline_mode<synchronous>, transform_indices = @transform_1, window_bounds = array<i64: 256, 128>}, {pipeline_mode = #tpu.pipeline_mode<synchronous>, transform_indices = @transform_2, window_bounds = array<i64: 1, 128>}, {pipeline_mode = #tpu.pipeline_mode<synchronous>, transform_indices = @transform_3, window_bounds = array<i64: 128, 32>}, {pipeline_mode = #tpu.pipeline_mode<synchronous>, transform_indices = @transform_4, window_bounds = array<i64: 1, 32>}, {pipeline_mode = #tpu.pipeline_mode<synchronous>, transform_indices = @transform_5, window_bounds = array<i64: 32, 128>}, {pipeline_mode = #tpu.pipeline_mode<synchronous>, transform_indices = @transform_6, window_bounds = array<i64: 1, 128>}, {transform_indices = @transform_7, window_bounds = array<i64: 8, 128>}]} {
    %0 = tpu.iota {dimensions = array<i32: 1>} : vector<8x256xi32>
    %c0 = arith.constant 0 : index
    %c0_0 = arith.constant 0 : index
    %1 = vector.load %arg1[%c0, %c0_0] : memref<8x8xi32, #tpu.memory_space<vmem>>, vector<8x1xi32>
    %2 = vector.broadcast %1 : vector<8x1xi32> to vector<8x256xi32>
    %3 = arith.cmpi eq, %0, %2 : vector<8x256xi32>
    %c0_1 = arith.constant 0 : index
    %c1 = arith.constant 1 : index
    %4 = vector.load %arg1[%c0_1, %c1] : memref<8x8xi32, #tpu.memory_space<vmem>>, vector<8x1xi32>
    %5 = vector.broadcast %4 : vector<8x1xi32> to vector<8x256xi32>
    %6 = arith.cmpi eq, %0, %5 : vector<8x256xi32>
    %7 = arith.ori %3, %6 : vector<8x256xi1>
    %c0_2 = arith.constant 0 : index
    %c2 = arith.constant 2 : index
    %8 = vector.load %arg1[%c0_2, %c2] : memref<8x8xi32, #tpu.memory_space<vmem>>, vector<8x1xi32>
    %9 = vector.broadcast %8 : vector<8x1xi32> to vector<8x256xi32>
    %10 = arith.cmpi eq, %0, %9 : vector<8x256xi32>
    %11 = arith.ori %7, %10 : vector<8x256xi1>
    %c0_3 = arith.constant 0 : index
    %c3 = arith.constant 3 : index
    %12 = vector.load %arg1[%c0_3, %c3] : memref<8x8xi32, #tpu.memory_space<vmem>>, vector<8x1xi32>
    %13 = vector.broadcast %12 : vector<8x1xi32> to vector<8x256xi32>
    %14 = arith.cmpi eq, %0, %13 : vector<8x256xi32>
    %15 = arith.ori %11, %14 : vector<8x256xi1>
    %c0_4 = arith.constant 0 : index
    %c4 = arith.constant 4 : index
    %16 = vector.load %arg1[%c0_4, %c4] : memref<8x8xi32, #tpu.memory_space<vmem>>, vector<8x1xi32>
    %17 = vector.broadcast %16 : vector<8x1xi32> to vector<8x256xi32>
    %18 = arith.cmpi eq, %0, %17 : vector<8x256xi32>
    %19 = arith.ori %15, %18 : vector<8x256xi1>
    %c0_5 = arith.constant 0 : index
    %c5 = arith.constant 5 : index
    %20 = vector.load %arg1[%c0_5, %c5] : memref<8x8xi32, #tpu.memory_space<vmem>>, vector<8x1xi32>
    %21 = vector.broadcast %20 : vector<8x1xi32> to vector<8x256xi32>
    %22 = arith.cmpi eq, %0, %21 : vector<8x256xi32>
    %23 = arith.ori %19, %22 : vector<8x256xi1>
    %c0_6 = arith.constant 0 : index
    %c6 = arith.constant 6 : index
    %24 = vector.load %arg1[%c0_6, %c6] : memref<8x8xi32, #tpu.memory_space<vmem>>, vector<8x1xi32>
    %25 = vector.broadcast %24 : vector<8x1xi32> to vector<8x256xi32>
    %26 = arith.cmpi eq, %0, %25 : vector<8x256xi32>
    %27 = arith.ori %23, %26 : vector<8x256xi1>
    %c0_7 = arith.constant 0 : index
    %c7 = arith.constant 7 : index
    %28 = vector.load %arg1[%c0_7, %c7] : memref<8x8xi32, #tpu.memory_space<vmem>>, vector<8x1xi32>
    %29 = vector.broadcast %28 : vector<8x1xi32> to vector<8x256xi32>
    %30 = arith.cmpi eq, %0, %29 : vector<8x256xi32>
    %31 = arith.ori %27, %30 : vector<8x256xi1>
    %32 = arith.extui %31 : vector<8x256xi1> to vector<8x256xi32>
    %33 = arith.sitofp %32 : vector<8x256xi32> to vector<8x256xf32>
    %34 = arith.truncf %33 : vector<8x256xf32> to vector<8x256xbf16>
    %c0_8 = arith.constant 0 : index
    %c0_9 = arith.constant 0 : index
    %35 = vector.load %arg2[%c0_8, %c0_9] : memref<256x128xbf16, #tpu.memory_space<vmem>>, vector<256x128xbf16>
    %cst = arith.constant dense<0.000000e+00> : vector<8x128xf32>
    %36 = tpu.matmul %34, %35, %cst {dimension_numbers = #tpu.dot_dimension_numbers<[1], [0], [0], [1], [0, 0, 1, 1], [], []>} : vector<8x256xbf16>, vector<256x128xbf16>, vector<8x128xf32> -> vector<8x128xf32>
    %c0_10 = arith.constant 0 : index
    %c0_11 = arith.constant 0 : index
    %37 = vector.load %arg3[%c0_10, %c0_11] : memref<1x128xf32, #tpu.memory_space<vmem>>, vector<1x128xf32>
    %38 = vector.broadcast %37 : vector<1x128xf32> to vector<8x128xf32>
    %39 = arith.addf %36, %38 : vector<8x128xf32>
    %cst_12 = arith.constant 5.000000e-01 : f32
    %40 = vector.broadcast %cst_12 : f32 to vector<8x128xf32>
    %41 = arith.mulf %40, %39 : vector<8x128xf32>
    %cst_13 = arith.constant 0.707106769 : f32
    %42 = vector.broadcast %cst_13 : f32 to vector<8x128xf32>
    %43 = arith.mulf %39, %42 : vector<8x128xf32>
    %44 = math.erf %43 : vector<8x128xf32>
    %cst_14 = arith.constant 1.000000e+00 : f32
    %45 = vector.broadcast %cst_14 : f32 to vector<8x128xf32>
    %46 = arith.addf %45, %44 : vector<8x128xf32>
    %47 = arith.mulf %41, %46 : vector<8x128xf32>
    %48 = arith.truncf %47 : vector<8x128xf32> to vector<8x128xbf16>
    %c0_15 = arith.constant 0 : index
    %c0_16 = arith.constant 0 : index
    %49 = vector.load %arg4[%c0_15, %c0_16] : memref<128x32xbf16, #tpu.memory_space<vmem>>, vector<128x32xbf16>
    %cst_17 = arith.constant dense<0.000000e+00> : vector<8x32xf32>
    %50 = tpu.matmul %48, %49, %cst_17 {dimension_numbers = #tpu.dot_dimension_numbers<[1], [0], [0], [1], [0, 0, 1, 1], [], []>} : vector<8x128xbf16>, vector<128x32xbf16>, vector<8x32xf32> -> vector<8x32xf32>
    %c0_18 = arith.constant 0 : index
    %c0_19 = arith.constant 0 : index
    %51 = vector.load %arg5[%c0_18, %c0_19] : memref<1x32xf32, #tpu.memory_space<vmem>>, vector<1x32xf32>
    %52 = vector.broadcast %51 : vector<1x32xf32> to vector<8x32xf32>
    %53 = arith.addf %50, %52 : vector<8x32xf32>
    %cst_20 = arith.constant 5.000000e-01 : f32
    %54 = vector.broadcast %cst_20 : f32 to vector<8x32xf32>
    %55 = arith.mulf %54, %53 : vector<8x32xf32>
    %cst_21 = arith.constant 0.707106769 : f32
    %56 = vector.broadcast %cst_21 : f32 to vector<8x32xf32>
    %57 = arith.mulf %53, %56 : vector<8x32xf32>
    %58 = math.erf %57 : vector<8x32xf32>
    %cst_22 = arith.constant 1.000000e+00 : f32
    %59 = vector.broadcast %cst_22 : f32 to vector<8x32xf32>
    %60 = arith.addf %59, %58 : vector<8x32xf32>
    %61 = arith.mulf %55, %60 : vector<8x32xf32>
    %c0_23 = arith.constant 0 : index
    %c0_24 = arith.constant 0 : index
    %62 = vector.load %arg6[%c0_23, %c0_24] : memref<32x128xf32, #tpu.memory_space<vmem>>, vector<32x128xf32>
    %cst_25 = arith.constant dense<0.000000e+00> : vector<8x128xf32>
    %63 = tpu.matmul %61, %62, %cst_25 {dimension_numbers = #tpu.dot_dimension_numbers<[1], [0], [0], [1], [0, 0, 1, 1], [], []>} : vector<8x32xf32>, vector<32x128xf32>, vector<8x128xf32> -> vector<8x128xf32>
    %c0_26 = arith.constant 0 : index
    %c0_27 = arith.constant 0 : index
    %64 = vector.load %arg7[%c0_26, %c0_27] : memref<1x128xf32, #tpu.memory_space<vmem>>, vector<1x128xf32>
    %65 = vector.broadcast %64 : vector<1x128xf32> to vector<8x128xf32>
    %66 = arith.addf %63, %65 : vector<8x128xf32>
    %c0_28 = arith.constant 0 : index
    %c0_29 = arith.constant 0 : index
    %67 = vector.load %arg8[%c0_28, %c0_29] : memref<8x128xf32, #tpu.memory_space<vmem>>, vector<8x128xf32>
    tpu.vector_store %arg8[%c0_28, %c0_29], %66 {strides = array<i32>} : memref<8x128xf32, #tpu.memory_space<vmem>>, vector<8x128xf32>,
    return
  }
  func.func @transform_0(%arg0: i32) -> (i32, i32) {
    %c0_i32 = arith.constant 0 : i32
    %c0_i32_0 = arith.constant 0 : i32
    return %arg0, %c0_i32 : i32, i32
  }
  func.func @transform_1(%arg0: i32) -> (i32, i32) {
    %c0_i32 = arith.constant 0 : i32
    %c0_i32_0 = arith.constant 0 : i32
    %c0_i32_1 = arith.constant 0 : i32
    return %c0_i32, %c0_i32_0 : i32, i32
  }
  func.func @transform_2(%arg0: i32) -> (i32, i32) {
    %c0_i32 = arith.constant 0 : i32
    %c0_i32_0 = arith.constant 0 : i32
    %c0_i32_1 = arith.constant 0 : i32
    return %c0_i32, %c0_i32_0 : i32, i32
  }
  func.func @transform_3(%arg0: i32) -> (i32, i32) {
    %c0_i32 = arith.constant 0 : i32
    %c0_i32_0 = arith.constant 0 : i32
    %c0_i32_1 = arith.constant 0 : i32
    return %c0_i32, %c0_i32_0 : i32, i32
  }
  func.func @transform_4(%arg0: i32) -> (i32, i32) {
    %c0_i32 = arith.constant 0 : i32
    %c0_i32_0 = arith.constant 0 : i32
    %c0_i32_1 = arith.constant 0 : i32
    return %c0_i32, %c0_i32_0 : i32, i32
  }
  func.func @transform_5(%arg0: i32) -> (i32, i32) {
    %c0_i32 = arith.constant 0 : i32
    %c0_i32_0 = arith.constant 0 : i32
    %c0_i32_1 = arith.constant 0 : i32
    return %c0_i32, %c0_i32_0 : i32, i32
  }
  func.func @transform_6(%arg0: i32) -> (i32, i32) {
    %c0_i32 = arith.constant 0 : i32
    %c0_i32_0 = arith.constant 0 : i32
    %c0_i32_1 = arith.constant 0 : i32
    return %c0_i32, %c0_i32_0 : i32, i32
  }
  func.func @transform_7(%arg0: i32) -> (i32, i32) {
    %c0_i32 = arith.constant 0 : i32
    %c0_i32_0 = arith.constant 0 : i32
    return %arg0, %c0_i32 : i32, i32
  }
}

module attributes {stable_mosaic.version = 11 : i64} {
  func.func @lin_model_kernel(%arg0: i32, %arg1: memref<8x8xi32, #tpu.memory_space<vmem>>, %arg2: memref<256x128xbf16, #tpu.memory_space<vmem>>, %arg3: memref<1x128xf32, #tpu.memory_space<vmem>>, %arg4: memref<128x32xbf16, #tpu.memory_space<vmem>>, %arg5: memref<1x32xf32, #tpu.memory_space<vmem>>, %arg6: memref<32x128xf32, #tpu.memory_space<vmem>>, %arg7: memref<1x128xf32, #tpu.memory_space<vmem>>, %arg8: memref<8x128xf32, #tpu.memory_space<vmem>>) attributes {dimension_semantics = [#tpu.dimension_semantics<parallel>], iteration_bounds = array<i64: 1>, scalar_prefetch = 0 : i64, scratch_operands = 0 : i64, tpu.core_type = #tpu.core_type<tc>, window_params = [{transform_indices = @transform_0, window_bounds = array<i64: 8, 8>}, {pipeline_mode = #tpu.pipeline_mode<synchronous>, transform_indices = @transform_1, window_bounds = array<i64: 256, 128>}, {pipeline_mode = #tpu.pipeline_mode<synchronous>, transform_indices = @transform_2, window_bounds = array<i64: 1, 128>}, {pipeline_mode = #tpu.pipeline_mode<synchronous>, transform_indices = @transform_3, window_bounds = array<i64: 128, 32>}, {pipeline_mode = #tpu.pipeline_mode<synchronous>, transform_indices = @transform_4, window_bounds = array<i64: 1, 32>}, {pipeline_mode = #tpu.pipeline_mode<synchronous>, transform_indices = @transform_5, window_bounds = array<i64: 32, 128>}, {pipeline_mode = #tpu.pipeline_mode<synchronous>, transform_indices = @transform_6, window_bounds = array<i64: 1, 128>}, {transform_indices = @transform_7, window_bounds = array<i64: 8, 128>}]} {
    %0 = tpu.iota {dimensions = array<i32: 1>} : vector<8x256xi32>
    %c0 = arith.constant 0 : index
    %c0_0 = arith.constant 0 : index
    %1 = vector.load %arg1[%c0, %c0_0] : memref<8x8xi32, #tpu.memory_space<vmem>>, vector<8x1xi32>
    %2 = vector.broadcast %1 : vector<8x1xi32> to vector<8x256xi32>
    %3 = arith.cmpi eq, %0, %2 : vector<8x256xi32>
    %c0_1 = arith.constant 0 : index
    %c1 = arith.constant 1 : index
    %4 = vector.load %arg1[%c0_1, %c1] : memref<8x8xi32, #tpu.memory_space<vmem>>, vector<8x1xi32>
    %5 = vector.broadcast %4 : vector<8x1xi32> to vector<8x256xi32>
    %6 = arith.cmpi eq, %0, %5 : vector<8x256xi32>
    %7 = arith.ori %3, %6 : vector<8x256xi1>
    %c0_2 = arith.constant 0 : index
    %c2 = arith.constant 2 : index
    %8 = vector.load %arg1[%c0_2, %c2] : memref<8x8xi32, #tpu.memory_space<vmem>>, vector<8x1xi32>
    %9 = vector.broadcast %8 : vector<8x1xi32> to vector<8x256xi32>
    %10 = arith.cmpi eq, %0, %9 : vector<8x256xi32>
    %11 = arith.ori %7, %10 : vector<8x256xi1>
    %c0_3 = arith.constant 0 : index
    %c3 = arith.constant 3 : index
    %12 = vector.load %arg1[%c0_3, %c3] : memref<8x8xi32, #tpu.memory_space<vmem>>, vector<8x1xi32>
    %13 = vector.broadcast %12 : vector<8x1xi32> to vector<8x256xi32>
    %14 = arith.cmpi eq, %0, %13 : vector<8x256xi32>
    %15 = arith.ori %11, %14 : vector<8x256xi1>
    %c0_4 = arith.constant 0 : index
    %c4 = arith.constant 4 : index
    %16 = vector.load %arg1[%c0_4, %c4] : memref<8x8xi32, #tpu.memory_space<vmem>>, vector<8x1xi32>
    %17 = vector.broadcast %16 : vector<8x1xi32> to vector<8x256xi32>
    %18 = arith.cmpi eq, %0, %17 : vector<8x256xi32>
    %19 = arith.ori %15, %18 : vector<8x256xi1>
    %c0_5 = arith.constant 0 : index
    %c5 = arith.constant 5 : index
    %20 = vector.load %arg1[%c0_5, %c5] : memref<8x8xi32, #tpu.memory_space<vmem>>, vector<8x1xi32>
    %21 = vector.broadcast %20 : vector<8x1xi32> to vector<8x256xi32>
    %22 = arith.cmpi eq, %0, %21 : vector<8x256xi32>
    %23 = arith.ori %19, %22 : vector<8x256xi1>
    %c0_6 = arith.constant 0 : index
    %c6 = arith.constant 6 : index
    %24 = vector.load %arg1[%c0_6, %c6] : memref<8x8xi32, #tpu.memory_space<vmem>>, vector<8x1xi32>
    %25 = vector.broadcast %24 : vector<8x1xi32> to vector<8x256xi32>
    %26 = arith.cmpi eq, %0, %25 : vector<8x256xi32>
    %27 = arith.ori %23, %26 : vector<8x256xi1>
    %c0_7 = arith.constant 0 : index
    %c7 = arith.constant 7 : index
    %28 = vector.load %arg1[%c0_7, %c7] : memref<8x8xi32, #tpu.memory_space<vmem>>, vector<8x1xi32>
    %29 = vector.broadcast %28 : vector<8x1xi32> to vector<8x256xi32>
    %30 = arith.cmpi eq, %0, %29 : vector<8x256xi32>
    %31 = arith.ori %27, %30 : vector<8x256xi1>
    %32 = arith.extui %31 : vector<8x256xi1> to vector<8x256xi32>
    %33 = arith.sitofp %32 : vector<8x256xi32> to vector<8x256xf32>
    %34 = arith.truncf %33 : vector<8x256xf32> to vector<8x256xbf16>
    %c0_8 = arith.constant 0 : index
    %c0_9 = arith.constant 0 : index
    %35 = vector.load %arg2[%c0_8, %c0_9] : memref<256x128xbf16, #tpu.memory_space<vmem>>, vector<256x128xbf16>
    %cst = arith.constant dense<0.000000e+00> : vector<8x128xf32>
    %36 = tpu.matmul %34, %35, %cst {dimension_numbers = #tpu.dot_dimension_numbers<[1], [0], [0], [1], [0, 0, 1, 1], [], []>} : vector<8x256xbf16>, vector<256x128xbf16>, vector<8x128xf32> -> vector<8x128xf32>
    %c0_10 = arith.constant 0 : index
    %c0_11 = arith.constant 0 : index
    %37 = vector.load %arg3[%c0_10, %c0_11] : memref<1x128xf32, #tpu.memory_space<vmem>>, vector<1x128xf32>
    %38 = vector.broadcast %37 : vector<1x128xf32> to vector<8x128xf32>
    %39 = arith.addf %36, %38 : vector<8x128xf32>
    %cst_12 = arith.constant 5.000000e-01 : f32
    %40 = vector.broadcast %cst_12 : f32 to vector<8x128xf32>
    %41 = arith.mulf %40, %39 : vector<8x128xf32>
    %cst_13 = arith.constant 0.707106769 : f32
    %42 = vector.broadcast %cst_13 : f32 to vector<8x128xf32>
    %43 = arith.mulf %39, %42 : vector<8x128xf32>
    %44 = math.erf %43 : vector<8x128xf32>
    %cst_14 = arith.constant 1.000000e+00 : f32
    %45 = vector.broadcast %cst_14 : f32 to vector<8x128xf32>
    %46 = arith.addf %45, %44 : vector<8x128xf32>
    %47 = arith.mulf %41, %46 : vector<8x128xf32>
    %48 = arith.truncf %47 : vector<8x128xf32> to vector<8x128xbf16>
    %c0_15 = arith.constant 0 : index
    %c0_16 = arith.constant 0 : index
    %49 = vector.load %arg4[%c0_15, %c0_16] : memref<128x32xbf16, #tpu.memory_space<vmem>>, vector<128x32xbf16>
    %cst_17 = arith.constant dense<0.000000e+00> : vector<8x32xf32>
    %50 = tpu.matmul %48, %49, %cst_17 {dimension_numbers = #tpu.dot_dimension_numbers<[1], [0], [0], [1], [0, 0, 1, 1], [], []>} : vector<8x128xbf16>, vector<128x32xbf16>, vector<8x32xf32> -> vector<8x32xf32>
    %c0_18 = arith.constant 0 : index
    %c0_19 = arith.constant 0 : index
    %51 = vector.load %arg5[%c0_18, %c0_19] : memref<1x32xf32, #tpu.memory_space<vmem>>, vector<1x32xf32>
    %52 = vector.broadcast %51 : vector<1x32xf32> to vector<8x32xf32>
    %53 = arith.addf %50, %52 : vector<8x32xf32>
    %cst_20 = arith.constant 5.000000e-01 : f32
    %54 = vector.broadcast %cst_20 : f32 to vector<8x32xf32>
    %55 = arith.mulf %54, %53 : vector<8x32xf32>
    %cst_21 = arith.constant 0.707106769 : f32
    %56 = vector.broadcast %cst_21 : f32 to vector<8x32xf32>
    %57 = arith.mulf %53, %56 : vector<8x32xf32>
    %58 = math.erf %57 : vector<8x32xf32>
    %cst_22 = arith.constant 1.000000e+00 : f32
    %59 = vector.broadcast %cst_22 : f32 to vector<8x32xf32>
    %60 = arith.addf %59, %58 : vector<8x32xf32>
    %61 = arith.mulf %55, %60 : vector<8x32xf32>
    %c0_23 = arith.constant 0 : index
    %c0_24 = arith.constant 0 : index
    %62 = vector.load %arg6[%c0_23, %c0_24] : memref<32x128xf32, #tpu.memory_space<vmem>>, vector<32x128xf32>
    %cst_25 = arith.constant dense<0.000000e+00> : vector<8x128xf32>
    %63 = tpu.matmul %61, %62, %cst_25 {dimension_numbers = #tpu.dot_dimension_numbers<[1], [0], [0], [1], [0, 0, 1, 1], [], []>} : vector<8x32xf32>, vector<32x128xf32>, vector<8x128xf32> -> vector<8x128xf32>
    %c0_26 = arith.constant 0 : index
    %c0_27 = arith.constant 0 : index
    %64 = vector.load %arg7[%c0_26, %c0_27] : memref<1x128xf32, #tpu.memory_space<vmem>>, vector<1x128xf32>
    %65 = vector.broadcast %64 : vector<1x128xf32> to vector<8x128xf32>
    %66 = arith.addf %63, %65 : vector<8x128xf32>
    %c0_28 = arith.constant 0 : index
    %c0_29 = arith.constant 0 : index
    %67 = vector.load %arg8[%c0_28, %c0_29] : memref<8x128xf32, #tpu.memory_space<vmem>>, vector<8x128xf32>
    tpu.vector_store %arg8[%c0_28, %c0_29], %66 {strides = array<i32>} : memref<8x128xf32, #tpu.memory_space<vmem>>, vector<8x128xf32>,
    return
  }
  func.func @transform_0(%arg0: i32) -> (i32, i32) {
    %c0_i32 = arith.constant 0 : i32
    %c0_i32_0 = arith.constant 0 : i32
    return %arg0, %c0_i32 : i32, i32
  }
  func.func @transform_1(%arg0: i32) -> (i32, i32) {
    %c0_i32 = arith.constant 0 : i32
    %c0_i32_0 = arith.constant 0 : i32
    %c0_i32_1 = arith.constant 0 : i32
    return %c0_i32, %c0_i32_0 : i32, i32
  }
  func.func @transform_2(%arg0: i32) -> (i32, i32) {
    %c0_i32 = arith.constant 0 : i32
    %c0_i32_0 = arith.constant 0 : i32
    %c0_i32_1 = arith.constant 0 : i32
    return %c0_i32, %c0_i32_0 : i32, i32
  }
  func.func @transform_3(%arg0: i32) -> (i32, i32) {
    %c0_i32 = arith.constant 0 : i32
    %c0_i32_0 = arith.constant 0 : i32
    %c0_i32_1 = arith.constant 0 : i32
    return %c0_i32, %c0_i32_0 : i32, i32
  }
  func.func @transform_4(%arg0: i32) -> (i32, i32) {
    %c0_i32 = arith.constant 0 : i32
    %c0_i32_0 = arith.constant 0 : i32
    %c0_i32_1 = arith.constant 0 : i32
    return %c0_i32, %c0_i32_0 : i32, i32
  }
  func.func @transform_5(%arg0: i32) -> (i32, i32) {
    %c0_i32 = arith.constant 0 : i32
    %c0_i32_0 = arith.constant 0 : i32
    %c0_i32_1 = arith.constant 0 : i32
    return %c0_i32, %c0_i32_0 : i32, i32
  }
  func.func @transform_6(%arg0: i32) -> (i32, i32) {
    %c0_i32 = arith.constant 0 : i32
    %c0_i32_0 = arith.constant 0 : i32
    %c0_i32_1 = arith.constant 0 : i32
    return %c0_i32, %c0_i32_0 : i32, i32
  }
  func.func @transform_7(%arg0: i32) -> (i32, i32) {
    %c0_i32 = arith.constant 0 : i32
    %c0_i32_0 = arith.constant 0 : i32
    return %arg0, %c0_i32 : i32, i32
  }
}

</mosaic_0001>

<llo_original>
// kernel: tpu_custom_call.1
$region0: #{tpu_custom_call.1}
  #allocation0 [shape = 'u32[]', space=smem, size = 0x4, offset = 0x4, fixed_abs, tag = 'smem constant byte address 0x4 - core index']
  #allocation1 [shape = 'u32[144,128]{1,0:T(1,128)}', space=vmem, size = 0x12000, scoped, tag = 'internal scratch']
  %s0 = inlined_call_operand.vmem [shape: s32[8,8], index: 0, kind: input, shape index: {}]
  %s1 = inlined_call_operand.hbm [shape: bf16[256,128], index: 1, kind: input, shape index: {}]
  %s2 = inlined_call_operand.vmem [shape: f32[1,128], index: 2, kind: input, shape index: {}]
  %s3 = inlined_call_operand.vmem [shape: bf16[128,32], index: 3, kind: input, shape index: {}]
  %s4 = inlined_call_operand.vmem [shape: f32[1,32], index: 4, kind: input, shape index: {}]
  %s5 = inlined_call_operand.vmem [shape: f32[32,128], index: 5, kind: input, shape index: {}]
  %s6 = inlined_call_operand.vmem [shape: f32[1,128], index: 6, kind: input, shape index: {}]
  %s7 = inlined_call_operand.hbm [shape: f32[8,128], index: 7, kind: output, shape index: {}]
  %s8 = sld [smem:[#allocation0]]
  $region42: #{tpu_custom_call.1} parent=0
    _
  %s10 = ssub.s32 1, %s8
  %s11 = scalar_select 0, %s10, %s8
  $region1: #{tpu_custom_call.1} parent=0
    #allocation2 [shape = 'u8[65536]{0}', space=vmem, size = 0x10000, scoped, tag = 'input window, operand 1, single buffered']
    #allocation3 [shape = 's32[1]{0}', space=sflag, size = 0x4, scoped, tag = 'scoped memory for tpu_custom_call.1']
    #allocation4 [shape = 's32[1]{0}', space=sflag, size = 0x4, scoped, tag = 'scoped memory for tpu_custom_call.1']
    #allocation5 [shape = 'u8[4096]{0}', space=vmem, size = 0x1000, scoped, tag = 'output window, operand 0, single buffered']
    %12 = vsyncpa [#allocation3], 0
    %13 = vsyncpa [#allocation4], 0
    // Predicated region
    $region2: #{tpu_custom_call.1} parent=1 // pred_check
      _
    $region3: #{tpu_custom_call.1} parent=1 // pred_check_branch
      %15 = sbr.rel (0) target = $region5
    $region4: #{tpu_custom_call.1} parent=1 // pred_region
      _
    $region5: #{tpu_custom_call.1} parent=1 // pred_fallthru
      _
    // Predicated region
    $region6: #{tpu_custom_call.1} parent=1 // pred_check
      _
    $region7: #{tpu_custom_call.1} parent=1 // pred_check_branch
      %17 = sbr.rel (0) target = $region9
    $region8: #{tpu_custom_call.1} parent=1 // pred_region
      %s19 = ssub.s32 2048, 2048
      %20 = vsyncadd [#allocation3], %s19
      %s21 = sshll.u32 [#allocation2], 4
      %s22 = int_to_ptr.vmem [resolvable:$true] %s21
      %27 = dma.hbm_to_vmem [thread:$0]  %s1, 2048, %s22, [#allocation3], 64, 64, 4
    $region9: #{tpu_custom_call.1} parent=1 // pred_fallthru
      _
    // Predicated region
    $region10: #{tpu_custom_call.1} parent=1 // pred_check
      _
    $region11: #{tpu_custom_call.1} parent=1 // pred_check_branch
      %29 = sbr.rel (0) target = $region13
    $region12: #{tpu_custom_call.1} parent=1 // pred_region
      _
    $region13: #{tpu_custom_call.1} parent=1 // pred_fallthru
      _
    // Predicated region
    $region14: #{tpu_custom_call.1} parent=1 // pred_check
      _
    $region15: #{tpu_custom_call.1} parent=1 // pred_check_branch
      %31 = sbr.rel (0) target = $region17
    $region16: #{tpu_custom_call.1} parent=1 // pred_region
      _
    $region17: #{tpu_custom_call.1} parent=1 // pred_fallthru
      _
    // Predicated region
    $region18: #{tpu_custom_call.1} parent=1 // pred_check
      _
    $region19: #{tpu_custom_call.1} parent=1 // pred_check_branch
      %33 = sbr.rel (0) target = $region21
    $region20: #{tpu_custom_call.1} parent=1 // pred_region
      _
    $region21: #{tpu_custom_call.1} parent=1 // pred_fallthru
      _
    // Predicated region
    $region22: #{tpu_custom_call.1} parent=1 // pred_check
      _
    $region23: #{tpu_custom_call.1} parent=1 // pred_check_branch
      %35 = sbr.rel (0) target = $region25
    $region24: #{tpu_custom_call.1} parent=1 // pred_region
      _
    $region25: #{tpu_custom_call.1} parent=1 // pred_fallthru
      _
    // Predicated region
    $region26: #{tpu_custom_call.1} parent=1 // pred_check
      _
    $region27: #{tpu_custom_call.1} parent=1 // pred_check_branch
      %37 = sbr.rel (0) target = $region29
    $region28: #{tpu_custom_call.1} parent=1 // pred_region
      _
    $region29: #{tpu_custom_call.1} parent=1 // pred_fallthru
      _
    // Predicated region
    $region30: #{tpu_custom_call.1} parent=1 // pred_check
      _
    $region31: #{tpu_custom_call.1} parent=1 // pred_check_branch
      %39 = sbr.rel (0) target = $region33
    $region32: #{tpu_custom_call.1} parent=1 // pred_region
      %40 = dma.done [#allocation3], 2048
    $region33: #{tpu_custom_call.1} parent=1 // pred_fallthru
      _
    %v42 = vlaneseq
    %v43 = vand.u32 %v42, 127
    %v44 = vadd.s32 %v43, 128
    %v45 = vld [vmem:[%s0] sm:$0xff]
    %46 = vset.pattern.permute.xlu0 0
    %47 = vperm.xlu0 %46, %v45
    %v48 = vpop.permute.xlu0 %47
    %vm49 = vcmp.eq.s32.totalorder %v43, %v48
    %vm50 = vcmp.eq.s32.totalorder %v44, %v48
    %51 = vset.pattern.permute.xlu0 1
    %52 = vperm.xlu0 %51, %v45
    %v53 = vpop.permute.xlu0 %52
    %vm54 = vcmp.eq.s32.totalorder %v43, %v53
    %vm55 = vcmp.eq.s32.totalorder %v44, %v53
    %vm56 = vmor %vm49, %vm54
    %vm57 = vmor %vm50, %vm55
    %58 = vset.pattern.permute.xlu0 2
    %59 = vperm.xlu0 %58, %v45
    %v60 = vpop.permute.xlu0 %59
    %vm61 = vcmp.eq.s32.totalorder %v43, %v60
    %vm62 = vcmp.eq.s32.totalorder %v44, %v60
    %vm63 = vmor %vm56, %vm61
    %vm64 = vmor %vm57, %vm62
    %65 = vset.pattern.permute.xlu0 3
    %66 = vperm.xlu0 %65, %v45
    %v67 = vpop.permute.xlu0 %66
    %vm68 = vcmp.eq.s32.totalorder %v43, %v67
    %vm69 = vcmp.eq.s32.totalorder %v44, %v67
    %vm70 = vmor %vm63, %vm68
    %vm71 = vmor %vm64, %vm69
    %72 = vset.pattern.permute.xlu0 4
    %73 = vperm.xlu0 %72, %v45
    %v74 = vpop.permute.xlu0 %73
    %vm75 = vcmp.eq.s32.totalorder %v43, %v74
    %vm76 = vcmp.eq.s32.totalorder %v44, %v74
    %vm77 = vmor %vm70, %vm75
    %vm78 = vmor %vm71, %vm76
    %79 = vset.pattern.permute.xlu0 5
    %80 = vperm.xlu0 %79, %v45
    %v81 = vpop.permute.xlu0 %80
    %vm82 = vcmp.eq.s32.totalorder %v43, %v81
    %vm83 = vcmp.eq.s32.totalorder %v44, %v81
    %vm84 = vmor %vm77, %vm82
    %vm85 = vmor %vm78, %vm83
    %86 = vset.pattern.permute.xlu0 6
    %87 = vperm.xlu0 %86, %v45
    %v88 = vpop.permute.xlu0 %87
    %vm89 = vcmp.eq.s32.totalorder %v43, %v88
    %vm90 = vcmp.eq.s32.totalorder %v44, %v88
    %vm91 = vmor %vm84, %vm89
    %vm92 = vmor %vm85, %vm90
    %93 = vset.pattern.permute.xlu0 7
    %94 = vperm.xlu0 %93, %v45
    %v95 = vpop.permute.xlu0 %94
    %vm96 = vcmp.eq.s32.totalorder %v43, %v95
    %vm97 = vcmp.eq.s32.totalorder %v44, %v95
    %vm98 = vmor %vm91, %vm96
    %vm99 = vmor %vm92, %vm97
    %v100 = vsel %vm98, 1, 0
    %v101 = vsel %vm99, 1, 0
    %v102 = vcvt.s32.f32 %v100
    %v103 = vcvt.s32.f32 %v101
    %v104 = vpack.c.bf16 %v102, %v102
    %v105 = vpack.c.bf16 %v103, %v103
    %v106 = vld [vmem:[#allocation2] sm:$0xf]
    %v107 = vld [vmem:[#allocation2 + $0x4] sm:$0xf]
    %v108 = vld [vmem:[#allocation2 + $0x8] sm:$0xf]
    %v109 = vld [vmem:[#allocation2 + $0xc] sm:$0xf]
    %v110 = vld [vmem:[#allocation2 + $0x10] sm:$0xf]
    %v111 = vld [vmem:[#allocation2 + $0x14] sm:$0xf]
    %v112 = vld [vmem:[#allocation2 + $0x18] sm:$0xf]
    %v113 = vld [vmem:[#allocation2 + $0x1c] sm:$0xf]
    %v114 = vld [vmem:[#allocation2 + $0x20] sm:$0xf]
    %v115 = vld [vmem:[#allocation2 + $0x24] sm:$0xf]
    %v116 = vld [vmem:[#allocation2 + $0x28] sm:$0xf]
    %v117 = vld [vmem:[#allocation2 + $0x2c] sm:$0xf]
    %v118 = vld [vmem:[#allocation2 + $0x30] sm:$0xf]
    %v119 = vld [vmem:[#allocation2 + $0x34] sm:$0xf]
    %v120 = vld [vmem:[#allocation2 + $0x38] sm:$0xf]
    %v121 = vld [vmem:[#allocation2 + $0x3c] sm:$0xf]
    %v122 = vld [vmem:[#allocation2 + $0x40] sm:$0xf]
    %v123 = vld [vmem:[#allocation2 + $0x44] sm:$0xf]
    %v124 = vld [vmem:[#allocation2 + $0x48] sm:$0xf]
    %v125 = vld [vmem:[#allocation2 + $0x4c] sm:$0xf]
    %v126 = vld [vmem:[#allocation2 + $0x50] sm:$0xf]
    %v127 = vld [vmem:[#allocation2 + $0x54] sm:$0xf]
    %v128 = vld [vmem:[#allocation2 + $0x58] sm:$0xf]
    %v129 = vld [vmem:[#allocation2 + $0x5c] sm:$0xf]
    %v130 = vld [vmem:[#allocation2 + $0x60] sm:$0xf]
    %v131 = vld [vmem:[#allocation2 + $0x64] sm:$0xf]
    %v132 = vld [vmem:[#allocation2 + $0x68] sm:$0xf]
    %v133 = vld [vmem:[#allocation2 + $0x6c] sm:$0xf]
    %v134 = vld [vmem:[#allocation2 + $0x70] sm:$0xf]
    %v135 = vld [vmem:[#allocation2 + $0x74] sm:$0xf]
    %v136 = vld [vmem:[#allocation2 + $0x78] sm:$0xf]
    %v137 = vld [vmem:[#allocation2 + $0x7c] sm:$0xf]
    %v138 = vld [vmem:[%s2] sm:$0x1]
    %v140 = vlaneseq
    %v141 = vshrl.u32 %v140, 7
    %v142 = vsub.s32 0, %v141
    %v143 = vrot.slane %v138, %v142
    %v177 = vunpack.c.l.b16 %v106
    %v178 = vunpack.c.l.b16 %v107
    %v179 = vunpack.c.l.b16 %v108
    %v180 = vunpack.c.l.b16 %v109
    %v181 = vunpack.c.l.b16 %v110
    %v182 = vunpack.c.l.b16 %v111
    %v183 = vunpack.c.l.b16 %v112
    %v184 = vunpack.c.l.b16 %v113
    %v185 = vunpack.c.l.b16 %v114
    %v186 = vunpack.c.l.b16 %v115
    %v187 = vunpack.c.l.b16 %v116
    %v188 = vunpack.c.l.b16 %v117
    %v189 = vunpack.c.l.b16 %v118
    %v190 = vunpack.c.l.b16 %v119
    %v191 = vunpack.c.l.b16 %v120
    %v192 = vunpack.c.l.b16 %v121
    %v193 = vunpack.c.l.b16 %v122
    %v194 = vunpack.c.l.b16 %v123
    %v195 = vunpack.c.l.b16 %v124
    %v196 = vunpack.c.l.b16 %v125
    %v197 = vunpack.c.l.b16 %v126
    %v198 = vunpack.c.l.b16 %v127
    %v199 = vunpack.c.l.b16 %v128
    %v200 = vunpack.c.l.b16 %v129
    %v201 = vunpack.c.l.b16 %v130
    %v202 = vunpack.c.l.b16 %v131
    %v203 = vunpack.c.l.b16 %v132
    %v204 = vunpack.c.l.b16 %v133
    %v205 = vunpack.c.l.b16 %v134
    %v206 = vunpack.c.l.b16 %v135
    %v207 = vunpack.c.l.b16 %v136
    %v208 = vunpack.c.l.b16 %v137
    %v209 = vpack.c.b16 %v178, %v177
    %v210 = vpack.c.b16 %v180, %v179
    %v211 = vpack.c.b16 %v182, %v181
    %v212 = vpack.c.b16 %v184, %v183
    %v213 = vpack.c.b16 %v186, %v185
    %v214 = vpack.c.b16 %v188, %v187
    %v215 = vpack.c.b16 %v190, %v189
    %v216 = vpack.c.b16 %v192, %v191
    %v217 = vpack.c.b16 %v194, %v193
    %v218 = vpack.c.b16 %v196, %v195
    %v219 = vpack.c.b16 %v198, %v197
    %v220 = vpack.c.b16 %v200, %v199
    %v221 = vpack.c.b16 %v202, %v201
    %v222 = vpack.c.b16 %v204, %v203
    %v223 = vpack.c.b16 %v206, %v205
    %v224 = vpack.c.b16 %v208, %v207
    %241 = vmatprep.subr.bf16.mxu0 0
    %242 = vmatpush1.bf16.msra.mxu0 %v209
    %243 = vmatprep.subr.bf16.mxu0 0
    %244 = vmatpush1.bf16.msra.mxu0 %v210
    %245 = vmatprep.subr.bf16.mxu0 0
    %246 = vmatpush1.bf16.msra.mxu0 %v211
    %247 = vmatprep.subr.bf16.mxu0 0
    %248 = vmatpush1.bf16.msra.mxu0 %v212
    %249 = vmatprep.subr.bf16.mxu0 0
    %250 = vmatpush1.bf16.msra.mxu0 %v213
    %251 = vmatprep.subr.bf16.mxu0 0
    %252 = vmatpush1.bf16.msra.mxu0 %v214
    %253 = vmatprep.subr.bf16.mxu0 0
    %254 = vmatpush1.bf16.msra.mxu0 %v215
    %255 = vmatprep.subr.bf16.mxu0 0
    %256 = vmatpush1.bf16.msra.mxu0 %v216
    %257 = vmatprep.subr.bf16.mxu0 0
    %258 = vmatpush1.bf16.msra.mxu0 %v217
    %259 = vmatprep.subr.bf16.mxu0 0
    %260 = vmatpush1.bf16.msra.mxu0 %v218
    %261 = vmatprep.subr.bf16.mxu0 0
    %262 = vmatpush1.bf16.msra.mxu0 %v219
    %263 = vmatprep.subr.bf16.mxu0 0
    %264 = vmatpush1.bf16.msra.mxu0 %v220
    %265 = vmatprep.subr.bf16.mxu0 0
    %266 = vmatpush1.bf16.msra.mxu0 %v221
    %267 = vmatprep.subr.bf16.mxu0 0
    %268 = vmatpush1.bf16.msra.mxu0 %v222
    %269 = vmatprep.subr.bf16.mxu0 0
    %270 = vmatpush1.bf16.msra.mxu0 %v223
    %271 = vmatprep.subr.bf16.mxu0 0
    %272 = vmatpush1.bf16.msra.mxu0 %v224
    %273 = vmatprep.mubr.bf16.mxu0 %v105
    %274 = vmatmul.mubr.bf16.gmra.mrb[0].mxu0 %v104
    %v275 = vpop.f32.mrb[0].mxu0
    %v276 = vadd.f32 %v143, %v275
    %v277 = vpop.f32.mrb[0].mxu0
    %v278 = vpop.f32.mrb[0].mxu0
    %v279 = vpop.f32.mrb[0].mxu0
    %280 = vdwg.mxu0
    %v281 = vmul.f32 %v276, 0.5
    %v282 = vmul.f32 %v276, 0.70710677
    %v283 = verf.f32.pop %v282
    %v284 = vadd.f32 %v283, 1.0
    %v285 = vmul.f32 %v281, %v284
    %v286 = vpack.c.bf16 %v285, %v285
    %v287 = vld [vmem:[%s3] sm:$0xf]
    %v288 = vld [vmem:[%s3 + $0x4] sm:$0xf]
    %v289 = vld [vmem:[%s3 + $0x8] sm:$0xf]
    %v290 = vld [vmem:[%s3 + $0xc] sm:$0xf]
    %v291 = vld [vmem:[%s3 + $0x10] sm:$0xf]
    %v292 = vld [vmem:[%s3 + $0x14] sm:$0xf]
    %v293 = vld [vmem:[%s3 + $0x18] sm:$0xf]
    %v294 = vld [vmem:[%s3 + $0x1c] sm:$0xf]
    %v295 = vld [vmem:[%s3 + $0x20] sm:$0xf]
    %v296 = vld [vmem:[%s3 + $0x24] sm:$0xf]
    %v297 = vld [vmem:[%s3 + $0x28] sm:$0xf]
    %v298 = vld [vmem:[%s3 + $0x2c] sm:$0xf]
    %v299 = vld [vmem:[%s3 + $0x30] sm:$0xf]
    %v300 = vld [vmem:[%s3 + $0x34] sm:$0xf]
    %v301 = vld [vmem:[%s3 + $0x38] sm:$0xf]
    %v302 = vld [vmem:[%s3 + $0x3c] sm:$0xf]
    %v303 = vld [vmem:[%s4] sm:$0x1]
    %v305 = vlaneseq
    %v306 = vshrl.u32 %v305, 7
    %v307 = vsub.s32 0, %v306
    %v308 = vrot.slane %v303, %v307
    %v326 = vunpack.c.l.b16 %v287
    %v327 = vunpack.c.l.b16 %v288
    %v328 = vunpack.c.l.b16 %v289
    %v329 = vunpack.c.l.b16 %v290
    %v330 = vunpack.c.l.b16 %v291
    %v331 = vunpack.c.l.b16 %v292
    %v332 = vunpack.c.l.b16 %v293
    %v333 = vunpack.c.l.b16 %v294
    %v334 = vunpack.c.l.b16 %v295
    %v335 = vunpack.c.l.b16 %v296
    %v336 = vunpack.c.l.b16 %v297
    %v337 = vunpack.c.l.b16 %v298
    %v338 = vunpack.c.l.b16 %v299
    %v339 = vunpack.c.l.b16 %v300
    %v340 = vunpack.c.l.b16 %v301
    %v341 = vunpack.c.l.b16 %v302
    %v342 = vpack.c.b16 %v327, %v326
    %v343 = vpack.c.b16 %v329, %v328
    %v344 = vpack.c.b16 %v331, %v330
    %v345 = vpack.c.b16 %v333, %v332
    %v346 = vpack.c.b16 %v335, %v334
    %v347 = vpack.c.b16 %v337, %v336
    %v348 = vpack.c.b16 %v339, %v338
    %v349 = vpack.c.b16 %v341, %v340
    %358 = vmatprep.subr.bf16.mxu0 0
    %359 = vmatpush1.bf16.msra.mxu0 %v342
    %360 = vmatprep.subr.bf16.mxu0 0
    %361 = vmatpush1.bf16.msra.mxu0 %v343
    %362 = vmatprep.subr.bf16.mxu0 0
    %363 = vmatpush1.bf16.msra.mxu0 %v344
    %364 = vmatprep.subr.bf16.mxu0 0
    %365 = vmatpush1.bf16.msra.mxu0 %v345
    %366 = vmatprep.subr.bf16.mxu0 0
    %367 = vmatpush1.bf16.msra.mxu0 %v346
    %368 = vmatprep.subr.bf16.mxu0 0
    %369 = vmatpush1.bf16.msra.mxu0 %v347
    %370 = vmatprep.subr.bf16.mxu0 0
    %371 = vmatpush1.bf16.msra.mxu0 %v348
    %372 = vmatprep.subr.bf16.mxu0 0
    %373 = vmatpush1.bf16.msra.mxu0 %v349
    %374 = vmatprep.subr.bf16.mxu0 0
    %375 = vmatpush1.bf16.msra.mxu0 0
    %376 = vmatprep.subr.bf16.mxu0 0
    %377 = vmatpush1.bf16.msra.mxu0 0
    %378 = vmatprep.subr.bf16.mxu0 0
    %379 = vmatpush1.bf16.msra.mxu0 0
    %380 = vmatprep.subr.bf16.mxu0 0
    %381 = vmatpush1.bf16.msra.mxu0 0
    %382 = vmatprep.subr.bf16.mxu0 0
    %383 = vmatpush1.bf16.msra.mxu0 0
    %384 = vmatprep.subr.bf16.mxu0 0
    %385 = vmatpush1.bf16.msra.mxu0 0
    %386 = vmatprep.subr.bf16.mxu0 0
    %387 = vmatpush1.bf16.msra.mxu0 0
    %388 = vmatprep.subr.bf16.mxu0 0
    %389 = vmatpush1.bf16.msra.mxu0 0
    %390 = vmatprep.mubr.bf16.mxu0 0
    %391 = vmatmul.mubr.bf16.gmra.mrb[0].mxu0 %v286
    %v392 = vpop.f32.mrb[0].mxu0
    %v393 = vadd.f32 %v308, %v392
    %v394 = vpop.f32.mrb[0].mxu0
    %v395 = vpop.f32.mrb[0].mxu0
    %v396 = vpop.f32.mrb[0].mxu0
    %397 = vdwg.mxu0
    %v398 = vmul.f32 %v393, 0.5
    %v399 = vmul.f32 %v393, 0.70710677
    %v400 = verf.f32.pop %v399
    %v401 = vadd.f32 %v400, 1.0
    %v402 = vmul.f32 %v398, %v401
    %v403 = vld [vmem:[%s5] sm:$0xff]
    %v404 = vld [vmem:[%s5 + $0x8] sm:$0xff]
    %v405 = vld [vmem:[%s5 + $0x10] sm:$0xff]
    %v406 = vld [vmem:[%s5 + $0x18] sm:$0xff]
    %v407 = vld [vmem:[%s6] sm:$0x1]
    %v409 = vlaneseq
    %v410 = vshrl.u32 %v409, 7
    %v411 = vsub.s32 0, %v410
    %v412 = vrot.slane %v407, %v411
    %vm414 = vcmask 261120
    %v416 = vsel %vm414, %v402, 0
    %418 = vmatprep.subr.mxu0 0.0
    %419 = vmatpush1.msra.mxu0 %v403
    %420 = vmatprep.subr.mxu0 0.0
    %421 = vmatpush1.msra.mxu0 %v404
    %422 = vmatprep.subr.mxu0 0.0
    %423 = vmatpush1.msra.mxu0 %v405
    %424 = vmatprep.subr.mxu0 0.0
    %425 = vmatpush1.msra.mxu0 %v406
    %426 = vmatprep.subr.mxu0 0.0
    %427 = vmatpush1.msra.mxu0 0.0
    %428 = vmatprep.subr.mxu0 0.0
    %429 = vmatpush1.msra.mxu0 0.0
    %430 = vmatprep.subr.mxu0 0.0
    %431 = vmatpush1.msra.mxu0 0.0
    %432 = vmatprep.subr.mxu0 0.0
    %433 = vmatpush1.msra.mxu0 0.0
    %434 = vmatprep.subr.mxu0 0.0
    %435 = vmatpush1.msra.mxu0 0.0
    %436 = vmatprep.subr.mxu0 0.0
    %437 = vmatpush1.msra.mxu0 0.0
    %438 = vmatprep.subr.mxu0 0.0
    %439 = vmatpush1.msra.mxu0 0.0
    %440 = vmatprep.subr.mxu0 0.0
    %441 = vmatpush1.msra.mxu0 0.0
    %442 = vmatprep.subr.mxu0 0.0
    %443 = vmatpush1.msra.mxu0 0.0
    %444 = vmatprep.subr.mxu0 0.0
    %445 = vmatpush1.msra.mxu0 0.0
    %446 = vmatprep.subr.mxu0 0.0
    %447 = vmatpush1.msra.mxu0 0.0
    %448 = vmatprep.subr.mxu0 0.0
    %449 = vmatpush1.msra.mxu0 0.0
    %450 = vmatprep.subr.mxu0 0.0
    %451 = vmatpush1.msra.mxu0 0.0
    %452 = vmatprep.subr.mxu0 0.0
    %453 = vmatpush1.msra.mxu0 0.0
    %454 = vmatprep.subr.mxu0 0.0
    %455 = vmatpush1.msra.mxu0 0.0
    %456 = vmatprep.subr.mxu0 0.0
    %457 = vmatpush1.msra.mxu0 0.0
    %458 = vmatprep.subr.mxu0 0.0
    %459 = vmatpush1.msra.mxu0 0.0
    %460 = vmatprep.subr.mxu0 0.0
    %461 = vmatpush1.msra.mxu0 0.0
    %462 = vmatprep.subr.mxu0 0.0
    %463 = vmatpush1.msra.mxu0 0.0
    %464 = vmatprep.subr.mxu0 0.0
    %465 = vmatpush1.msra.mxu0 0.0
    %466 = vmatprep.subr.mxu0 0.0
    %467 = vmatpush1.msra.mxu0 0.0
    %468 = vmatprep.subr.mxu0 0.0
    %469 = vmatpush1.msra.mxu0 0.0
    %470 = vmatprep.subr.mxu0 0.0
    %471 = vmatpush1.msra.mxu0 0.0
    %472 = vmatprep.subr.mxu0 0.0
    %473 = vmatpush1.msra.mxu0 0.0
    %474 = vmatprep.subr.mxu0 0.0
    %475 = vmatpush1.msra.mxu0 0.0
    %476 = vmatprep.subr.mxu0 0.0
    %477 = vmatpush1.msra.mxu0 0.0
    %478 = vmatprep.subr.mxu0 0.0
    %479 = vmatpush1.msra.mxu0 0.0
    %480 = vmatprep.subr.mxu0 0.0
    %481 = vmatpush1.msra.mxu0 0.0
    %482 = vmatprep.mubr.f32.mxu0 0.0
    %483 = vmatmul.mubr.f32.gmra.mrb[0].mxu0 %v416
    %v484 = vpop.f32.mrb[0].mxu0
    %v485 = vadd.f32 %v412, %v484
    %v486 = vpop.f32.mrb[0].mxu0
    %487 = vdwg.mxu0
    %488 = vst [vmem:[#allocation5] sm:$0xff] %v485
    // Predicated region
    $region34: #{tpu_custom_call.1} parent=1 // pred_check
      _
    $region35: #{tpu_custom_call.1} parent=1 // pred_check_branch
      %490 = sbr.rel (0) target = $region37
    $region36: #{tpu_custom_call.1} parent=1 // pred_region
      %s492 = ssub.s32 128, 128
      %493 = vsyncadd [#allocation4], %s492
      %s495 = sshll.u32 [#allocation5], 4
      %s496 = int_to_ptr.vmem [resolvable:$true] %s495
      %498 = dma.vmem_to_hbm [thread:$0]  %s496, 128, %s7, [#allocation4]
    $region37: #{tpu_custom_call.1} parent=1 // pred_fallthru
      _
    // Predicated region
    $region38: #{tpu_custom_call.1} parent=1 // pred_check
      _
    $region39: #{tpu_custom_call.1} parent=1 // pred_check_branch
      %500 = sbr.rel (0) target = $region41
    $region40: #{tpu_custom_call.1} parent=1 // pred_region
      %501 = dma.done [#allocation4], 128
    $region41: #{tpu_custom_call.1} parent=1 // pred_fallthru
      _
    %502 = vsyncpa [#allocation3], 1
    %503 = vsyncpa [#allocation4], 1

// kernel: tpu_custom_call.1
$region0: #{tpu_custom_call.1}
  #allocation0 [shape = 'u32[]', space=smem, size = 0x4, offset = 0x4, fixed_abs, tag = 'smem constant byte address 0x4 - core index']
  #allocation1 [shape = 'u32[144,128]{1,0:T(1,128)}', space=vmem, size = 0x12000, scoped, tag = 'internal scratch']
  %s0 = inlined_call_operand.vmem [shape: s32[8,8], index: 0, kind: input, shape index: {}]
  %s1 = inlined_call_operand.hbm [shape: bf16[256,128], index: 1, kind: input, shape index: {}]
  %s2 = inlined_call_operand.vmem [shape: f32[1,128], index: 2, kind: input, shape index: {}]
  %s3 = inlined_call_operand.vmem [shape: bf16[128,32], index: 3, kind: input, shape index: {}]
  %s4 = inlined_call_operand.vmem [shape: f32[1,32], index: 4, kind: input, shape index: {}]
  %s5 = inlined_call_operand.vmem [shape: f32[32,128], index: 5, kind: input, shape index: {}]
  %s6 = inlined_call_operand.vmem [shape: f32[1,128], index: 6, kind: input, shape index: {}]
  %s7 = inlined_call_operand.hbm [shape: f32[8,128], index: 7, kind: output, shape index: {}]
  %s8 = sld [smem:[#allocation0]]
  $region42: #{tpu_custom_call.1} parent=0
    _
  %s10 = ssub.s32 1, %s8
  %s11 = scalar_select 0, %s10, %s8
  $region1: #{tpu_custom_call.1} parent=0
    #allocation2 [shape = 'u8[65536]{0}', space=vmem, size = 0x10000, scoped, tag = 'input window, operand 1, single buffered']
    #allocation3 [shape = 's32[1]{0}', space=sflag, size = 0x4, scoped, tag = 'scoped memory for tpu_custom_call.1']
    #allocation4 [shape = 's32[1]{0}', space=sflag, size = 0x4, scoped, tag = 'scoped memory for tpu_custom_call.1']
    #allocation5 [shape = 'u8[4096]{0}', space=vmem, size = 0x1000, scoped, tag = 'output window, operand 0, single buffered']
    %12 = vsyncpa [#allocation3], 0
    %13 = vsyncpa [#allocation4], 0
    // Predicated region
    $region2: #{tpu_custom_call.1} parent=1 // pred_check
      _
    $region3: #{tpu_custom_call.1} parent=1 // pred_check_branch
      %15 = sbr.rel (0) target = $region5
    $region4: #{tpu_custom_call.1} parent=1 // pred_region
      _
    $region5: #{tpu_custom_call.1} parent=1 // pred_fallthru
      _
    // Predicated region
    $region6: #{tpu_custom_call.1} parent=1 // pred_check
      _
    $region7: #{tpu_custom_call.1} parent=1 // pred_check_branch
      %17 = sbr.rel (0) target = $region9
    $region8: #{tpu_custom_call.1} parent=1 // pred_region
      %s19 = ssub.s32 2048, 2048
      %20 = vsyncadd [#allocation3], %s19
      %s21 = sshll.u32 [#allocation2], 4
      %s22 = int_to_ptr.vmem [resolvable:$true] %s21
      %27 = dma.hbm_to_vmem [thread:$0]  %s1, 2048, %s22, [#allocation3], 64, 64, 4
    $region9: #{tpu_custom_call.1} parent=1 // pred_fallthru
      _
    // Predicated region
    $region10: #{tpu_custom_call.1} parent=1 // pred_check
      _
    $region11: #{tpu_custom_call.1} parent=1 // pred_check_branch
      %29 = sbr.rel (0) target = $region13
    $region12: #{tpu_custom_call.1} parent=1 // pred_region
      _
    $region13: #{tpu_custom_call.1} parent=1 // pred_fallthru
      _
    // Predicated region
    $region14: #{tpu_custom_call.1} parent=1 // pred_check
      _
    $region15: #{tpu_custom_call.1} parent=1 // pred_check_branch
      %31 = sbr.rel (0) target = $region17
    $region16: #{tpu_custom_call.1} parent=1 // pred_region
      _
    $region17: #{tpu_custom_call.1} parent=1 // pred_fallthru
      _
    // Predicated region
    $region18: #{tpu_custom_call.1} parent=1 // pred_check
      _
    $region19: #{tpu_custom_call.1} parent=1 // pred_check_branch
      %33 = sbr.rel (0) target = $region21
    $region20: #{tpu_custom_call.1} parent=1 // pred_region
      _
    $region21: #{tpu_custom_call.1} parent=1 // pred_fallthru
      _
    // Predicated region
    $region22: #{tpu_custom_call.1} parent=1 // pred_check
      _
    $region23: #{tpu_custom_call.1} parent=1 // pred_check_branch
      %35 = sbr.rel (0) target = $region25
    $region24: #{tpu_custom_call.1} parent=1 // pred_region
      _
    $region25: #{tpu_custom_call.1} parent=1 // pred_fallthru
      _
    // Predicated region
    $region26: #{tpu_custom_call.1} parent=1 // pred_check
      _
    $region27: #{tpu_custom_call.1} parent=1 // pred_check_branch
      %37 = sbr.rel (0) target = $region29
    $region28: #{tpu_custom_call.1} parent=1 // pred_region
      _
    $region29: #{tpu_custom_call.1} parent=1 // pred_fallthru
      _
    // Predicated region
    $region30: #{tpu_custom_call.1} parent=1 // pred_check
      _
    $region31: #{tpu_custom_call.1} parent=1 // pred_check_branch
      %39 = sbr.rel (0) target = $region33
    $region32: #{tpu_custom_call.1} parent=1 // pred_region
      %40 = dma.done [#allocation3], 2048
    $region33: #{tpu_custom_call.1} parent=1 // pred_fallthru
      _
    %v42 = vlaneseq
    %v43 = vand.u32 %v42, 127
    %v44 = vadd.s32 %v43, 128
    %v45 = vld [vmem:[%s0] sm:$0xff]
    %46 = vset.pattern.permute.xlu0 0
    %47 = vperm.xlu0 %46, %v45
    %v48 = vpop.permute.xlu0 %47
    %vm49 = vcmp.eq.s32.totalorder %v43, %v48
    %vm50 = vcmp.eq.s32.totalorder %v44, %v48
    %51 = vset.pattern.permute.xlu0 1
    %52 = vperm.xlu0 %51, %v45
    %v53 = vpop.permute.xlu0 %52
    %vm54 = vcmp.eq.s32.totalorder %v43, %v53
    %vm55 = vcmp.eq.s32.totalorder %v44, %v53
    %vm56 = vmor %vm49, %vm54
    %vm57 = vmor %vm50, %vm55
    %58 = vset.pattern.permute.xlu0 2
    %59 = vperm.xlu0 %58, %v45
    %v60 = vpop.permute.xlu0 %59
    %vm61 = vcmp.eq.s32.totalorder %v43, %v60
    %vm62 = vcmp.eq.s32.totalorder %v44, %v60
    %vm63 = vmor %vm56, %vm61
    %vm64 = vmor %vm57, %vm62
    %65 = vset.pattern.permute.xlu0 3
    %66 = vperm.xlu0 %65, %v45
    %v67 = vpop.permute.xlu0 %66
    %vm68 = vcmp.eq.s32.totalorder %v43, %v67
    %vm69 = vcmp.eq.s32.totalorder %v44, %v67
    %vm70 = vmor %vm63, %vm68
    %vm71 = vmor %vm64, %vm69
    %72 = vset.pattern.permute.xlu0 4
    %73 = vperm.xlu0 %72, %v45
    %v74 = vpop.permute.xlu0 %73
    %vm75 = vcmp.eq.s32.totalorder %v43, %v74
    %vm76 = vcmp.eq.s32.totalorder %v44, %v74
    %vm77 = vmor %vm70, %vm75
    %vm78 = vmor %vm71, %vm76
    %79 = vset.pattern.permute.xlu0 5
    %80 = vperm.xlu0 %79, %v45
    %v81 = vpop.permute.xlu0 %80
    %vm82 = vcmp.eq.s32.totalorder %v43, %v81
    %vm83 = vcmp.eq.s32.totalorder %v44, %v81
    %vm84 = vmor %vm77, %vm82
    %vm85 = vmor %vm78, %vm83
    %86 = vset.pattern.permute.xlu0 6
    %87 = vperm.xlu0 %86, %v45
    %v88 = vpop.permute.xlu0 %87
    %vm89 = vcmp.eq.s32.totalorder %v43, %v88
    %vm90 = vcmp.eq.s32.totalorder %v44, %v88
    %vm91 = vmor %vm84, %vm89
    %vm92 = vmor %vm85, %vm90
    %93 = vset.pattern.permute.xlu0 7
    %94 = vperm.xlu0 %93, %v45
    %v95 = vpop.permute.xlu0 %94
    %vm96 = vcmp.eq.s32.totalorder %v43, %v95
    %vm97 = vcmp.eq.s32.totalorder %v44, %v95
    %vm98 = vmor %vm91, %vm96
    %vm99 = vmor %vm92, %vm97
    %v100 = vsel %vm98, 1, 0
    %v101 = vsel %vm99, 1, 0
    %v102 = vcvt.s32.f32 %v100
    %v103 = vcvt.s32.f32 %v101
    %v104 = vpack.c.bf16 %v102, %v102
    %v105 = vpack.c.bf16 %v103, %v103
    %v106 = vld [vmem:[#allocation2] sm:$0xf]
    %v107 = vld [vmem:[#allocation2 + $0x4] sm:$0xf]
    %v108 = vld [vmem:[#allocation2 + $0x8] sm:$0xf]
    %v109 = vld [vmem:[#allocation2 + $0xc] sm:$0xf]
    %v110 = vld [vmem:[#allocation2 + $0x10] sm:$0xf]
    %v111 = vld [vmem:[#allocation2 + $0x14] sm:$0xf]
    %v112 = vld [vmem:[#allocation2 + $0x18] sm:$0xf]
    %v113 = vld [vmem:[#allocation2 + $0x1c] sm:$0xf]
    %v114 = vld [vmem:[#allocation2 + $0x20] sm:$0xf]
    %v115 = vld [vmem:[#allocation2 + $0x24] sm:$0xf]
    %v116 = vld [vmem:[#allocation2 + $0x28] sm:$0xf]
    %v117 = vld [vmem:[#allocation2 + $0x2c] sm:$0xf]
    %v118 = vld [vmem:[#allocation2 + $0x30] sm:$0xf]
    %v119 = vld [vmem:[#allocation2 + $0x34] sm:$0xf]
    %v120 = vld [vmem:[#allocation2 + $0x38] sm:$0xf]
    %v121 = vld [vmem:[#allocation2 + $0x3c] sm:$0xf]
    %v122 = vld [vmem:[#allocation2 + $0x40] sm:$0xf]
    %v123 = vld [vmem:[#allocation2 + $0x44] sm:$0xf]
    %v124 = vld [vmem:[#allocation2 + $0x48] sm:$0xf]
    %v125 = vld [vmem:[#allocation2 + $0x4c] sm:$0xf]
    %v126 = vld [vmem:[#allocation2 + $0x50] sm:$0xf]
    %v127 = vld [vmem:[#allocation2 + $0x54] sm:$0xf]
    %v128 = vld [vmem:[#allocation2 + $0x58] sm:$0xf]
    %v129 = vld [vmem:[#allocation2 + $0x5c] sm:$0xf]
    %v130 = vld [vmem:[#allocation2 + $0x60] sm:$0xf]
    %v131 = vld [vmem:[#allocation2 + $0x64] sm:$0xf]
    %v132 = vld [vmem:[#allocation2 + $0x68] sm:$0xf]
    %v133 = vld [vmem:[#allocation2 + $0x6c] sm:$0xf]
    %v134 = vld [vmem:[#allocation2 + $0x70] sm:$0xf]
    %v135 = vld [vmem:[#allocation2 + $0x74] sm:$0xf]
    %v136 = vld [vmem:[#allocation2 + $0x78] sm:$0xf]
    %v137 = vld [vmem:[#allocation2 + $0x7c] sm:$0xf]
    %v138 = vld [vmem:[%s2] sm:$0x1]
    %v140 = vlaneseq
    %v141 = vshrl.u32 %v140, 7
    %v142 = vsub.s32 0, %v141
    %v143 = vrot.slane %v138, %v142
    %v177 = vunpack.c.l.b16 %v106
    %v178 = vunpack.c.l.b16 %v107
    %v179 = vunpack.c.l.b16 %v108
    %v180 = vunpack.c.l.b16 %v109
    %v181 = vunpack.c.l.b16 %v110
    %v182 = vunpack.c.l.b16 %v111
    %v183 = vunpack.c.l.b16 %v112
    %v184 = vunpack.c.l.b16 %v113
    %v185 = vunpack.c.l.b16 %v114
    %v186 = vunpack.c.l.b16 %v115
    %v187 = vunpack.c.l.b16 %v116
    %v188 = vunpack.c.l.b16 %v117
    %v189 = vunpack.c.l.b16 %v118
    %v190 = vunpack.c.l.b16 %v119
    %v191 = vunpack.c.l.b16 %v120
    %v192 = vunpack.c.l.b16 %v121
    %v193 = vunpack.c.l.b16 %v122
    %v194 = vunpack.c.l.b16 %v123
    %v195 = vunpack.c.l.b16 %v124
    %v196 = vunpack.c.l.b16 %v125
    %v197 = vunpack.c.l.b16 %v126
    %v198 = vunpack.c.l.b16 %v127
    %v199 = vunpack.c.l.b16 %v128
    %v200 = vunpack.c.l.b16 %v129
    %v201 = vunpack.c.l.b16 %v130
    %v202 = vunpack.c.l.b16 %v131
    %v203 = vunpack.c.l.b16 %v132
    %v204 = vunpack.c.l.b16 %v133
    %v205 = vunpack.c.l.b16 %v134
    %v206 = vunpack.c.l.b16 %v135
    %v207 = vunpack.c.l.b16 %v136
    %v208 = vunpack.c.l.b16 %v137
    %v209 = vpack.c.b16 %v178, %v177
    %v210 = vpack.c.b16 %v180, %v179
    %v211 = vpack.c.b16 %v182, %v181
    %v212 = vpack.c.b16 %v184, %v183
    %v213 = vpack.c.b16 %v186, %v185
    %v214 = vpack.c.b16 %v188, %v187
    %v215 = vpack.c.b16 %v190, %v189
    %v216 = vpack.c.b16 %v192, %v191
    %v217 = vpack.c.b16 %v194, %v193
    %v218 = vpack.c.b16 %v196, %v195
    %v219 = vpack.c.b16 %v198, %v197
    %v220 = vpack.c.b16 %v200, %v199
    %v221 = vpack.c.b16 %v202, %v201
    %v222 = vpack.c.b16 %v204, %v203
    %v223 = vpack.c.b16 %v206, %v205
    %v224 = vpack.c.b16 %v208, %v207
    %241 = vmatprep.subr.bf16.mxu0 0
    %242 = vmatpush1.bf16.msra.mxu0 %v209
    %243 = vmatprep.subr.bf16.mxu0 0
    %244 = vmatpush1.bf16.msra.mxu0 %v210
    %245 = vmatprep.subr.bf16.mxu0 0
    %246 = vmatpush1.bf16.msra.mxu0 %v211
    %247 = vmatprep.subr.bf16.mxu0 0
    %248 = vmatpush1.bf16.msra.mxu0 %v212
    %249 = vmatprep.subr.bf16.mxu0 0
    %250 = vmatpush1.bf16.msra.mxu0 %v213
    %251 = vmatprep.subr.bf16.mxu0 0
    %252 = vmatpush1.bf16.msra.mxu0 %v214
    %253 = vmatprep.subr.bf16.mxu0 0
    %254 = vmatpush1.bf16.msra.mxu0 %v215
    %255 = vmatprep.subr.bf16.mxu0 0
    %256 = vmatpush1.bf16.msra.mxu0 %v216
    %257 = vmatprep.subr.bf16.mxu0 0
    %258 = vmatpush1.bf16.msra.mxu0 %v217
    %259 = vmatprep.subr.bf16.mxu0 0
    %260 = vmatpush1.bf16.msra.mxu0 %v218
    %261 = vmatprep.subr.bf16.mxu0 0
    %262 = vmatpush1.bf16.msra.mxu0 %v219
    %263 = vmatprep.subr.bf16.mxu0 0
    %264 = vmatpush1.bf16.msra.mxu0 %v220
    %265 = vmatprep.subr.bf16.mxu0 0
    %266 = vmatpush1.bf16.msra.mxu0 %v221
    %267 = vmatprep.subr.bf16.mxu0 0
    %268 = vmatpush1.bf16.msra.mxu0 %v222
    %269 = vmatprep.subr.bf16.mxu0 0
    %270 = vmatpush1.bf16.msra.mxu0 %v223
    %271 = vmatprep.subr.bf16.mxu0 0
    %272 = vmatpush1.bf16.msra.mxu0 %v224
    %273 = vmatprep.mubr.bf16.mxu0 %v105
    %274 = vmatmul.mubr.bf16.gmra.mrb[0].mxu0 %v104
    %v275 = vpop.f32.mrb[0].mxu0
    %v276 = vadd.f32 %v143, %v275
    %v277 = vpop.f32.mrb[0].mxu0
    %v278 = vpop.f32.mrb[0].mxu0
    %v279 = vpop.f32.mrb[0].mxu0
    %280 = vdwg.mxu0
    %v281 = vmul.f32 %v276, 0.5
    %v282 = vmul.f32 %v276, 0.70710677
    %v283 = verf.f32.pop %v282
    %v284 = vadd.f32 %v283, 1.0
    %v285 = vmul.f32 %v281, %v284
    %v286 = vpack.c.bf16 %v285, %v285
    %v287 = vld [vmem:[%s3] sm:$0xf]
    %v288 = vld [vmem:[%s3 + $0x4] sm:$0xf]
    %v289 = vld [vmem:[%s3 + $0x8] sm:$0xf]
    %v290 = vld [vmem:[%s3 + $0xc] sm:$0xf]
    %v291 = vld [vmem:[%s3 + $0x10] sm:$0xf]
    %v292 = vld [vmem:[%s3 + $0x14] sm:$0xf]
    %v293 = vld [vmem:[%s3 + $0x18] sm:$0xf]
    %v294 = vld [vmem:[%s3 + $0x1c] sm:$0xf]
    %v295 = vld [vmem:[%s3 + $0x20] sm:$0xf]
    %v296 = vld [vmem:[%s3 + $0x24] sm:$0xf]
    %v297 = vld [vmem:[%s3 + $0x28] sm:$0xf]
    %v298 = vld [vmem:[%s3 + $0x2c] sm:$0xf]
    %v299 = vld [vmem:[%s3 + $0x30] sm:$0xf]
    %v300 = vld [vmem:[%s3 + $0x34] sm:$0xf]
    %v301 = vld [vmem:[%s3 + $0x38] sm:$0xf]
    %v302 = vld [vmem:[%s3 + $0x3c] sm:$0xf]
    %v303 = vld [vmem:[%s4] sm:$0x1]
    %v305 = vlaneseq
    %v306 = vshrl.u32 %v305, 7
    %v307 = vsub.s32 0, %v306
    %v308 = vrot.slane %v303, %v307
    %v326 = vunpack.c.l.b16 %v287
    %v327 = vunpack.c.l.b16 %v288
    %v328 = vunpack.c.l.b16 %v289
    %v329 = vunpack.c.l.b16 %v290
    %v330 = vunpack.c.l.b16 %v291
    %v331 = vunpack.c.l.b16 %v292
    %v332 = vunpack.c.l.b16 %v293
    %v333 = vunpack.c.l.b16 %v294
    %v334 = vunpack.c.l.b16 %v295
    %v335 = vunpack.c.l.b16 %v296
    %v336 = vunpack.c.l.b16 %v297
    %v337 = vunpack.c.l.b16 %v298
    %v338 = vunpack.c.l.b16 %v299
    %v339 = vunpack.c.l.b16 %v300
    %v340 = vunpack.c.l.b16 %v301
    %v341 = vunpack.c.l.b16 %v302
    %v342 = vpack.c.b16 %v327, %v326
    %v343 = vpack.c.b16 %v329, %v328
    %v344 = vpack.c.b16 %v331, %v330
    %v345 = vpack.c.b16 %v333, %v332
    %v346 = vpack.c.b16 %v335, %v334
    %v347 = vpack.c.b16 %v337, %v336
    %v348 = vpack.c.b16 %v339, %v338
    %v349 = vpack.c.b16 %v341, %v340
    %358 = vmatprep.subr.bf16.mxu0 0
    %359 = vmatpush1.bf16.msra.mxu0 %v342
    %360 = vmatprep.subr.bf16.mxu0 0
    %361 = vmatpush1.bf16.msra.mxu0 %v343
    %362 = vmatprep.subr.bf16.mxu0 0
    %363 = vmatpush1.bf16.msra.mxu0 %v344
    %364 = vmatprep.subr.bf16.mxu0 0
    %365 = vmatpush1.bf16.msra.mxu0 %v345
    %366 = vmatprep.subr.bf16.mxu0 0
    %367 = vmatpush1.bf16.msra.mxu0 %v346
    %368 = vmatprep.subr.bf16.mxu0 0
    %369 = vmatpush1.bf16.msra.mxu0 %v347
    %370 = vmatprep.subr.bf16.mxu0 0
    %371 = vmatpush1.bf16.msra.mxu0 %v348
    %372 = vmatprep.subr.bf16.mxu0 0
    %373 = vmatpush1.bf16.msra.mxu0 %v349
    %374 = vmatprep.subr.bf16.mxu0 0
    %375 = vmatpush1.bf16.msra.mxu0 0
    %376 = vmatprep.subr.bf16.mxu0 0
    %377 = vmatpush1.bf16.msra.mxu0 0
    %378 = vmatprep.subr.bf16.mxu0 0
    %379 = vmatpush1.bf16.msra.mxu0 0
    %380 = vmatprep.subr.bf16.mxu0 0
    %381 = vmatpush1.bf16.msra.mxu0 0
    %382 = vmatprep.subr.bf16.mxu0 0
    %383 = vmatpush1.bf16.msra.mxu0 0
    %384 = vmatprep.subr.bf16.mxu0 0
    %385 = vmatpush1.bf16.msra.mxu0 0
    %386 = vmatprep.subr.bf16.mxu0 0
    %387 = vmatpush1.bf16.msra.mxu0 0
    %388 = vmatprep.subr.bf16.mxu0 0
    %389 = vmatpush1.bf16.msra.mxu0 0
    %390 = vmatprep.mubr.bf16.mxu0 0
    %391 = vmatmul.mubr.bf16.gmra.mrb[0].mxu0 %v286
    %v392 = vpop.f32.mrb[0].mxu0
    %v393 = vadd.f32 %v308, %v392
    %v394 = vpop.f32.mrb[0].mxu0
    %v395 = vpop.f32.mrb[0].mxu0
    %v396 = vpop.f32.mrb[0].mxu0
    %397 = vdwg.mxu0
    %v398 = vmul.f32 %v393, 0.5
    %v399 = vmul.f32 %v393, 0.70710677
    %v400 = verf.f32.pop %v399
    %v401 = vadd.f32 %v400, 1.0
    %v402 = vmul.f32 %v398, %v401
    %v403 = vld [vmem:[%s5] sm:$0xff]
    %v404 = vld [vmem:[%s5 + $0x8] sm:$0xff]
    %v405 = vld [vmem:[%s5 + $0x10] sm:$0xff]
    %v406 = vld [vmem:[%s5 + $0x18] sm:$0xff]
    %v407 = vld [vmem:[%s6] sm:$0x1]
    %v409 = vlaneseq
    %v410 = vshrl.u32 %v409, 7
    %v411 = vsub.s32 0, %v410
    %v412 = vrot.slane %v407, %v411
    %vm414 = vcmask 261120
    %v416 = vsel %vm414, %v402, 0
    %418 = vmatprep.subr.mxu0 0.0
    %419 = vmatpush1.msra.mxu0 %v403
    %420 = vmatprep.subr.mxu0 0.0
    %421 = vmatpush1.msra.mxu0 %v404
    %422 = vmatprep.subr.mxu0 0.0
    %423 = vmatpush1.msra.mxu0 %v405
    %424 = vmatprep.subr.mxu0 0.0
    %425 = vmatpush1.msra.mxu0 %v406
    %426 = vmatprep.subr.mxu0 0.0
    %427 = vmatpush1.msra.mxu0 0.0
    %428 = vmatprep.subr.mxu0 0.0
    %429 = vmatpush1.msra.mxu0 0.0
    %430 = vmatprep.subr.mxu0 0.0
    %431 = vmatpush1.msra.mxu0 0.0
    %432 = vmatprep.subr.mxu0 0.0
    %433 = vmatpush1.msra.mxu0 0.0
    %434 = vmatprep.subr.mxu0 0.0
    %435 = vmatpush1.msra.mxu0 0.0
    %436 = vmatprep.subr.mxu0 0.0
    %437 = vmatpush1.msra.mxu0 0.0
    %438 = vmatprep.subr.mxu0 0.0
    %439 = vmatpush1.msra.mxu0 0.0
    %440 = vmatprep.subr.mxu0 0.0
    %441 = vmatpush1.msra.mxu0 0.0
    %442 = vmatprep.subr.mxu0 0.0
    %443 = vmatpush1.msra.mxu0 0.0
    %444 = vmatprep.subr.mxu0 0.0
    %445 = vmatpush1.msra.mxu0 0.0
    %446 = vmatprep.subr.mxu0 0.0
    %447 = vmatpush1.msra.mxu0 0.0
    %448 = vmatprep.subr.mxu0 0.0
    %449 = vmatpush1.msra.mxu0 0.0
    %450 = vmatprep.subr.mxu0 0.0
    %451 = vmatpush1.msra.mxu0 0.0
    %452 = vmatprep.subr.mxu0 0.0
    %453 = vmatpush1.msra.mxu0 0.0
    %454 = vmatprep.subr.mxu0 0.0
    %455 = vmatpush1.msra.mxu0 0.0
    %456 = vmatprep.subr.mxu0 0.0
    %457 = vmatpush1.msra.mxu0 0.0
    %458 = vmatprep.subr.mxu0 0.0
    %459 = vmatpush1.msra.mxu0 0.0
    %460 = vmatprep.subr.mxu0 0.0
    %461 = vmatpush1.msra.mxu0 0.0
    %462 = vmatprep.subr.mxu0 0.0
    %463 = vmatpush1.msra.mxu0 0.0
    %464 = vmatprep.subr.mxu0 0.0
    %465 = vmatpush1.msra.mxu0 0.0
    %466 = vmatprep.subr.mxu0 0.0
    %467 = vmatpush1.msra.mxu0 0.0
    %468 = vmatprep.subr.mxu0 0.0
    %469 = vmatpush1.msra.mxu0 0.0
    %470 = vmatprep.subr.mxu0 0.0
    %471 = vmatpush1.msra.mxu0 0.0
    %472 = vmatprep.subr.mxu0 0.0
    %473 = vmatpush1.msra.mxu0 0.0
    %474 = vmatprep.subr.mxu0 0.0
    %475 = vmatpush1.msra.mxu0 0.0
    %476 = vmatprep.subr.mxu0 0.0
    %477 = vmatpush1.msra.mxu0 0.0
    %478 = vmatprep.subr.mxu0 0.0
    %479 = vmatpush1.msra.mxu0 0.0
    %480 = vmatprep.subr.mxu0 0.0
    %481 = vmatpush1.msra.mxu0 0.0
    %482 = vmatprep.mubr.f32.mxu0 0.0
    %483 = vmatmul.mubr.f32.gmra.mrb[0].mxu0 %v416
    %v484 = vpop.f32.mrb[0].mxu0
    %v485 = vadd.f32 %v412, %v484
    %v486 = vpop.f32.mrb[0].mxu0
    %487 = vdwg.mxu0
    %488 = vst [vmem:[#allocation5] sm:$0xff] %v485
    // Predicated region
    $region34: #{tpu_custom_call.1} parent=1 // pred_check
      _
    $region35: #{tpu_custom_call.1} parent=1 // pred_check_branch
      %490 = sbr.rel (0) target = $region37
    $region36: #{tpu_custom_call.1} parent=1 // pred_region
      %s492 = ssub.s32 128, 128
      %493 = vsyncadd [#allocation4], %s492
      %s495 = sshll.u32 [#allocation5], 4
      %s496 = int_to_ptr.vmem [resolvable:$true] %s495
      %498 = dma.vmem_to_hbm [thread:$0]  %s496, 128, %s7, [#allocation4]
    $region37: #{tpu_custom_call.1} parent=1 // pred_fallthru
      _
    // Predicated region
    $region38: #{tpu_custom_call.1} parent=1 // pred_check
      _
    $region39: #{tpu_custom_call.1} parent=1 // pred_check_branch
      %500 = sbr.rel (0) target = $region41
    $region40: #{tpu_custom_call.1} parent=1 // pred_region
      %501 = dma.done [#allocation4], 128
    $region41: #{tpu_custom_call.1} parent=1 // pred_fallthru
      _
    %502 = vsyncpa [#allocation3], 1
    %503 = vsyncpa [#allocation4], 1

</llo_original>
